<compile_context>
chip_gen: v5e
topology: v5e:2x2
jax: 0.10.0
libtpu: 0.0.40
codegen_flags: <defaults>
</compile_context>

<pallas_src>
import functools

import jax
import jax.numpy as jnp
from jax.experimental import pallas as pl
from jax.experimental.pallas import tpu as pltpu

_LANES = 128
_SUBLANES = 8


def _mvn_kernel(x_ref, mean_ref, invstd_ref, o_ref):
    # x_ref/o_ref: (TR, Df); mean_ref/invstd_ref: (1, Df) f32, broadcast over rows.
    x = x_ref[...].astype(jnp.float32)
    o_ref[...] = ((x - mean_ref[...]) * invstd_ref[...]).astype(o_ref.dtype)


def _round_up(v, m):
    return ((v + m - 1) // m) * m


@functools.partial(jax.jit, static_argnames=("target_tile_bytes",))
def mean_variance_norm(x, global_mean, global_invstd, *, target_tile_bytes=2 << 20):
    """Apply (x - mean) * invstd along the last axis.

    x:             [..., D]
    global_mean:   [D]  (kept f32 inside the kernel)
    global_invstd: [D]  (kept f32 inside the kernel)
    """
    orig_shape = x.shape
    D = orig_shape[-1]
    rows = 1
    for s in orig_shape[:-1]:
        rows *= s

    mean_f32 = global_mean.astype(jnp.float32)
    invstd_f32 = global_invstd.astype(jnp.float32)

    # Lane-dense fold: pack `fold` consecutive logical rows into one row of
    # width fold*D == 128.  Exact only when D divides 128 and fold divides the
    # row count; otherwise fall back to the plain (rows, D) layout.
    fold = 1
    if D < _LANES and _LANES % D == 0 and rows % (_LANES // D) == 0:
        fold = _LANES // D

    rows_f = rows // fold
    Df = D * fold

    x2d = x.reshape(rows_f, Df)                      # contiguous reshape: no copy
    mean2d = jnp.tile(mean_f32, fold).reshape(1, Df)
    invstd2d = jnp.tile(invstd_f32, fold).reshape(1, Df)

    # Rows per tile: target ~target_tile_bytes per x/out buffer, multiple of 8,
    # and keep at least 2 grid steps when the array is big enough (v7x megacore).
    itemsize = max(jnp.dtype(x.dtype).itemsize, 4)   # conservative (f32 compute)
    t = max(_SUBLANES,
            (target_tile_bytes // (Df * itemsize)) // _SUBLANES * _SUBLANES)
    half = _round_up(-(-rows_f // 2), _SUBLANES)     # cdiv(rows_f, 2) rounded up to 8
    t = min(t, max(_SUBLANES, half))

    if rows_f <= t:
        # Single block exactly covering the (small) array: block dims == array dims.
        block_rows = rows_f
        grid = (1,)
    else:
        # Ragged last block (if any) is read-padded / store-masked by Pallas.
        block_rows = t
        grid = (pl.cdiv(rows_f, t),)

    out = pl.pallas_call(
        _mvn_kernel,
        out_shape=jax.ShapeDtypeStruct((rows_f, Df), x.dtype),
        grid=grid,
        in_specs=[
            pl.BlockSpec((block_rows, Df), lambda i: (i, 0)),
            pl.BlockSpec((1, Df), lambda i: (0, 0)),
            pl.BlockSpec((1, Df), lambda i: (0, 0)),
        ],
        out_specs=pl.BlockSpec((block_rows, Df), lambda i: (i, 0)),
        compiler_params=pltpu.CompilerParams(
            dimension_semantics=("parallel",),
        ),
    )(x2d, mean2d, invstd2d)

    return out.reshape(orig_shape)


if __name__ == "__main__":
    key = jax.random.PRNGKey(0)
    k_x, k_m, k_s, k_x2 = jax.random.split(key, 4)

    # Module config: input_size = 32; input shape [batch=2, seq=8, input_size=32]
    input_size = 32
    x = jax.random.normal(k_x, (2, 8, input_size), dtype=jnp.float32)

    # Parameters per __init__ (zeros / ones), perturbed deterministically so the
    # kernel does nontrivial work.
    global_mean = jnp.zeros((input_size,), jnp.float32) + 0.1 * jax.random.normal(
        k_m, (input_size,), dtype=jnp.float32
    )
    global_invstd = jnp.ones((input_size,), jnp.float32) + 0.1 * jax.random.normal(
        k_s, (input_size,), dtype=jnp.float32
    )

    out = mean_variance_norm(x, global_mean, global_invstd)
    out = jax.block_until_ready(out)

    ref = (x - global_mean) * global_invstd
    assert out.shape == x.shape and out.dtype == x.dtype
    assert jnp.allclose(out, ref, atol=1e-6, rtol=1e-6)

    # Second small case exercising the no-fold fallback + ragged last block
    # (rows = 14 is not a multiple of the fold factor 4).
    x2 = jax.random.normal(k_x2, (2, 7, input_size), dtype=jnp.float32)
    out2 = jax.block_until_ready(mean_variance_norm(x2, global_mean, global_invstd))
    ref2 = (x2 - global_mean) * global_invstd
    assert jnp.allclose(out2, ref2, atol=1e-6, rtol=1e-6)

    print("KERNEL_OK")
</pallas_src>

<mosaic_0001>
module attributes {stable_mosaic.version = 11 : i64} {
  func.func @_mvn_kernel(%arg0: i32, %arg1: memref<4x128xf32, #tpu.memory_space<vmem>>, %arg2: memref<1x128xf32, #tpu.memory_space<vmem>>, %arg3: memref<1x128xf32, #tpu.memory_space<vmem>>, %arg4: memref<4x128xf32, #tpu.memory_space<vmem>>) attributes {dimension_semantics = [#tpu.dimension_semantics<parallel>], iteration_bounds = array<i64: 1>, scalar_prefetch = 0 : i64, scratch_operands = 0 : i64, tpu.core_type = #tpu.core_type<tc>, window_params = [{transform_indices = @transform_0, window_bounds = array<i64: 4, 128>}, {pipeline_mode = #tpu.pipeline_mode<synchronous>, transform_indices = @transform_1, window_bounds = array<i64: 1, 128>}, {pipeline_mode = #tpu.pipeline_mode<synchronous>, transform_indices = @transform_2, window_bounds = array<i64: 1, 128>}, {transform_indices = @transform_3, window_bounds = array<i64: 4, 128>}]} {
    %c0 = arith.constant 0 : index
    %c0_0 = arith.constant 0 : index
    %0 = vector.load %arg1[%c0, %c0_0] : memref<4x128xf32, #tpu.memory_space<vmem>>, vector<4x128xf32>
    %c0_1 = arith.constant 0 : index
    %c0_2 = arith.constant 0 : index
    %1 = vector.load %arg2[%c0_1, %c0_2] : memref<1x128xf32, #tpu.memory_space<vmem>>, vector<1x128xf32>
    %2 = vector.broadcast %1 : vector<1x128xf32> to vector<4x128xf32>
    %3 = arith.subf %0, %2 : vector<4x128xf32>
    %c0_3 = arith.constant 0 : index
    %c0_4 = arith.constant 0 : index
    %4 = vector.load %arg3[%c0_3, %c0_4] : memref<1x128xf32, #tpu.memory_space<vmem>>, vector<1x128xf32>
    %5 = vector.broadcast %4 : vector<1x128xf32> to vector<4x128xf32>
    %6 = arith.mulf %3, %5 : vector<4x128xf32>
    %c0_5 = arith.constant 0 : index
    %c0_6 = arith.constant 0 : index
    %7 = vector.load %arg4[%c0_5, %c0_6] : memref<4x128xf32, #tpu.memory_space<vmem>>, vector<4x128xf32>
    tpu.vector_store %arg4[%c0_5, %c0_6], %6 {strides = array<i32>} : memref<4x128xf32, #tpu.memory_space<vmem>>, vector<4x128xf32>,
    return
  }
  func.func @transform_0(%arg0: i32) -> (i32, i32) {
    %c0_i32 = arith.constant 0 : i32
    %c0_i32_0 = arith.constant 0 : i32
    return %arg0, %c0_i32 : i32, i32
  }
  func.func @transform_1(%arg0: i32) -> (i32, i32) {
    %c0_i32 = arith.constant 0 : i32
    %c0_i32_0 = arith.constant 0 : i32
    %c0_i32_1 = arith.constant 0 : i32
    return %c0_i32, %c0_i32_0 : i32, i32
  }
  func.func @transform_2(%arg0: i32) -> (i32, i32) {
    %c0_i32 = arith.constant 0 : i32
    %c0_i32_0 = arith.constant 0 : i32
    %c0_i32_1 = arith.constant 0 : i32
    return %c0_i32, %c0_i32_0 : i32, i32
  }
  func.func @transform_3(%arg0: i32) -> (i32, i32) {
    %c0_i32 = arith.constant 0 : i32
    %c0_i32_0 = arith.constant 0 : i32
    return %arg0, %c0_i32 : i32, i32
  }
}

</mosaic_0001>

<llo_original>
// kernel: tile.14
$region0: #{tile.14}
  %s0 = inlined_call_operand.vmem [shape: f32[4,32], index: 0, kind: input, shape index: {}]
  %s1 = inlined_call_operand.vmem [shape: f32[1,128], index: 1, kind: output, shape index: {}]
  $region1: #{tile.14} parent=0
    #allocation0 [shape = 'u8[4096]{0}', space=vmem, size = 0x1000, scoped, tag = 'scoped mem for output reshape']
    #allocation1 [shape = 'u8[4096]{0}', space=vmem, size = 0x1000, scoped, tag = 'scoped mem for input reshape']
    %s3 = ssub.s32 16, 1
    %v4 = vld [vmem:[%s0] sm:%s3]
    %5 = vst [vmem:[#allocation1] sm:%s3] %v4
    %v6 = vld [vmem:[#allocation1] sm:$0x1]
    %vm7 = vcmask 261120
    %8 = vst.msk [vmem:[#allocation0] sm:$0x1] %vm7, %v6
    %s9 = scalar_lea.vmem [#allocation1], 3
    %v10 = vld [vmem:[%s9] sm:$0x1]
    %11 = vrot.lane.b32.xlu0 %v10, 96
    %v12 = vpop.permute.xlu0 %11
    %vm13 = vcmask 1048320
    %14 = vst.msk [vmem:[#allocation0] sm:$0x1] %vm13, %v12
    %s15 = scalar_lea.vmem [#allocation1], 2
    %v16 = vld [vmem:[%s15] sm:$0x1]
    %17 = vrot.lane.b32.xlu0 %v16, 64
    %v18 = vpop.permute.xlu0 %17
    %vm19 = vcmask 785920
    %20 = vst.msk [vmem:[#allocation0] sm:$0x1] %vm19, %v18
    %s21 = scalar_lea.vmem [#allocation1], 1
    %v22 = vld [vmem:[%s21] sm:$0x1]
    %23 = vrot.lane.b32.xlu0 %v22, 32
    %v24 = vpop.permute.xlu0 %23
    %vm25 = vcmask 523520
    %26 = vst.msk [vmem:[#allocation0] sm:$0x1] %vm25, %v24
    %s28 = ssub.s32 2, 1
    %v29 = vld [vmem:[#allocation0] sm:%s28]
    %s31 = ssub.s32 2, 1
    %32 = vst [vmem:[%s1] sm:%s31] %v29

// kernel: tile.13
$region0: #{tile.13}
  #allocation0 [shape = 's32[1]{0}', space=sflag, size = 0x4, scoped, tag = 'scoped memory for tile.13']
  %s0 = inlined_call_operand.vmem [shape: f32[32], index: 0, kind: input, shape index: {}]
  %s1 = inlined_call_operand.vmem [shape: f32[4,32], index: 1, kind: output, shape index: {}]
  // Predicated region
  $region2: #{tile.13} parent=0 // pred_check
    _
  $region3: #{tile.13} parent=0 // pred_check_branch
    %3 = sbr.rel (0) target = $region5
  $region4: #{tile.13} parent=0 // pred_region
    _
  $region5: #{tile.13} parent=0 // pred_fallthru
    _
  %v4 = vld [vmem:[%s0] ss:$0 sm:$0xff]
  %5 = vst [vmem:[%s1] sm:$0xf] %v4

// kernel: mean_variance_norm.1
$region0: #{mean_variance_norm.1}
  #allocation0 [shape = 'u32[]', space=smem, size = 0x4, offset = 0x4, fixed_abs, tag = 'smem constant byte address 0x4 - core index']
  #allocation1 [shape = 'u32[72,128]{1,0:T(1,128)}', space=vmem, size = 0x9000, scoped, tag = 'internal scratch']
  %s0 = inlined_call_operand.vmem [shape: f32[4,128], index: 0, kind: input, shape index: {}]
  %s1 = inlined_call_operand.vmem [shape: f32[1,128], index: 1, kind: input, shape index: {}]
  %s2 = inlined_call_operand.vmem [shape: f32[1,128], index: 2, kind: input, shape index: {}]
  %s3 = inlined_call_operand.vmem [shape: f32[4,128], index: 3, kind: output, shape index: {}]
  %s4 = sld [smem:[#allocation0]]
  $region22: #{mean_variance_norm.1} parent=0
    _
  %s6 = ssub.s32 1, %s4
  %s7 = scalar_select 0, %s6, %s4
  // Predicated region
  $region2: #{mean_variance_norm.1} parent=0 // pred_check
    _
  $region3: #{mean_variance_norm.1} parent=0 // pred_check_branch
    %9 = sbr.rel (0) target = $region5
  $region4: #{mean_variance_norm.1} parent=0 // pred_region
    _
  $region5: #{mean_variance_norm.1} parent=0 // pred_fallthru
    _
  // Predicated region
  $region6: #{mean_variance_norm.1} parent=0 // pred_check
    _
  $region7: #{mean_variance_norm.1} parent=0 // pred_check_branch
    %11 = sbr.rel (0) target = $region9
  $region8: #{mean_variance_norm.1} parent=0 // pred_region
    _
  $region9: #{mean_variance_norm.1} parent=0 // pred_fallthru
    _
  // Predicated region
  $region10: #{mean_variance_norm.1} parent=0 // pred_check
    _
  $region11: #{mean_variance_norm.1} parent=0 // pred_check_branch
    %13 = sbr.rel (0) target = $region13
  $region12: #{mean_variance_norm.1} parent=0 // pred_region
    _
  $region13: #{mean_variance_norm.1} parent=0 // pred_fallthru
    _
  %v14 = vld [vmem:[%s0] sm:$0xf]
  %v15 = vld [vmem:[%s1] sm:$0x1]
  %v17 = vperm.slane %v15, 0
  %v19 = vsub.f32 %v14, %v17
  %v20 = vld [vmem:[%s2] sm:$0x1]
  %v22 = vperm.slane %v20, 0
  %v24 = vmul.f32 %v19, %v22
  %25 = vst [vmem:[%s3] sm:$0xf] %v24
  // Predicated region
  $region14: #{mean_variance_norm.1} parent=0 // pred_check
    _
  $region15: #{mean_variance_norm.1} parent=0 // pred_check_branch
    %27 = sbr.rel (0) target = $region17
  $region16: #{mean_variance_norm.1} parent=0 // pred_region
    _
  $region17: #{mean_variance_norm.1} parent=0 // pred_fallthru
    _
  // Predicated region
  $region18: #{mean_variance_norm.1} parent=0 // pred_check
    _
  $region19: #{mean_variance_norm.1} parent=0 // pred_check_branch
    %29 = sbr.rel (0) target = $region21
  $region20: #{mean_variance_norm.1} parent=0 // pred_region
    _
  $region21: #{mean_variance_norm.1} parent=0 // pred_fallthru
    _

</llo_original>
